<compile_context>
chip_gen: v5e
topology: v5e:2x2
jax: 0.10.0
libtpu: 0.0.40
codegen_flags: <defaults>
</compile_context>

<pallas_src>
import math
from functools import partial

import jax
import jax.numpy as jnp
from jax.experimental import pallas as pl
from jax.experimental.pallas import tpu as pltpu


def _round_up(x, m):
    return -(-x // m) * m


def _stacked_lstm_kernel(x0_ref, hc0_ref, w0_ref, wr_ref, b_ref, out_ref, xh_ref,
                         *, hidden_size, num_layers, in_size):
    """Whole stack in one invocation; fully unrolled static loop over layers.

    Scratch slab layout (xh_ref, width Kmax = max(H + D0, 2H)):
        lanes [0:H)      -> recurrent state h_0[l]  (rewritten every layer)
        lanes [H:H+D_in) -> this layer's input (external feed for l=0, h_{l-1} after)
    so every layer is ONE MXU matmul:  [h | x] @ [Wh^T ; Wi^T] + (b_i + b_h).
    """
    H = hidden_size
    L = num_layers
    D0 = in_size
    B = x0_ref.shape[0]

    # Hoisted out of the layer loop (JAX does not CSE broadcast_in_dim).
    lane = jax.lax.broadcasted_iota(jnp.int32, (B, 4 * H), 1)
    is_sig = lane < 3 * H                      # i|f|o lanes -> sigmoid, g lanes -> tanh

    # Layer 0's external input feed goes into the "input" slot of the [h | x] slab.
    xh_ref[:, H:H + D0] = x0_ref[...]

    for l in range(L):                         # static L -> fully unrolled
        hc = hc0_ref[l]                        # (B, 2H) == [h_0[l] | c_0[l]]
        xh_ref[:, 0:H] = hc[:, 0:H]            # recurrent h into the "h" slot
        c_prev = hc[:, H:2 * H]

        if l == 0:
            k_l = H + D0
            w = w0_ref[...]                    # (H + D0, 4H)
        else:
            k_l = 2 * H
            w = wr_ref[l - 1]                  # (2H, 4H)

        lhs = xh_ref[:, 0:k_l].astype(w.dtype)
        preact = jnp.dot(lhs, w, preferred_element_type=jnp.float32) + b_ref[l]

        # One full-width sigmoid; g lanes fixed up with tanh(x) = 2*sigmoid(2x) - 1.
        scaled = jnp.where(is_sig, preact, preact + preact)
        s = jax.nn.sigmoid(scaled)
        gates = jnp.where(is_sig, s, s + s - 1.0)       # packed [i | f | o | g]

        i_t = gates[:, 0 * H:1 * H]
        f_t = gates[:, 1 * H:2 * H]
        o_t = gates[:, 2 * H:3 * H]
        g_t = gates[:, 3 * H:4 * H]

        c_t = f_t * c_prev + i_t * g_t
        h_t = o_t * jnp.tanh(c_t)

        # Lane-dense packed output row: [i | f | o | g | h | c | (unwritten pad)].
        out_ref[l, :, 0:4 * H] = gates
        out_ref[l, :, 4 * H:5 * H] = h_t
        out_ref[l, :, 5 * H:6 * H] = c_t

        if l + 1 < L:
            # Input feeding: next layer consumes this layer's h_t.
            xh_ref[:, H:2 * H] = h_t


def init_stacked_lstm_params(key, num_layers, input_size, rnn_size):
    """Xavier-normal weights, zero biases, PyTorch (4H, D_in) layout (reset_parameters)."""
    params = []
    d_in = input_size
    for _ in range(num_layers):
        key, k1, k2 = jax.random.split(key, 3)
        std_i = math.sqrt(2.0 / (d_in + 4 * rnn_size))
        std_h = math.sqrt(2.0 / (rnn_size + 4 * rnn_size))
        wi = jax.random.normal(k1, (4 * rnn_size, d_in), jnp.float32) * std_i
        wh = jax.random.normal(k2, (4 * rnn_size, rnn_size), jnp.float32) * std_h
        bi = jnp.zeros((4 * rnn_size,), jnp.float32)
        bh = jnp.zeros((4 * rnn_size,), jnp.float32)
        params.append((wi, wh, bi, bh))
        d_in = rnn_size
    return params


def prep_stacked_params(params, input_size, rnn_size, weight_dtype=jnp.float32):
    """Hoisted out of the forward path: transpose, concat [Wh^T; Wi^T], sum biases.

    Layer 0 keeps its own (input_size + H, 4H) slab (no zero-padded K rows); layers
    1..L-1 are stacked as (L-1, 2H, 4H).  Weights optionally cast to bf16 (halves
    weight DMA on v6e/v7x); biases and elementwise math stay f32.
    """
    L = len(params)
    H = rnn_size
    D0 = input_size

    wi0, wh0, _, _ = params[0]
    W0 = jnp.concatenate([wh0.T, wi0.T], axis=0).astype(weight_dtype)      # (H+D0, 4H)

    if L > 1:
        Wr = jnp.stack([jnp.concatenate([wh.T, wi.T], axis=0)
                        for (wi, wh, _, _) in params[1:]]).astype(weight_dtype)
    else:
        Wr = jnp.zeros((1, 2 * H, 4 * H), weight_dtype)   # dummy, never read

    b = jnp.stack([(bi + bh).reshape(1, 4 * H)
                   for (_, _, bi, bh) in params]).astype(jnp.float32)       # (L,1,4H)
    return W0, Wr, b, D0, H


def _block_bytes(shape, dtype):
    """VMEM bytes of a block after (sublane, 128-lane) tile padding."""
    itemsize = jnp.dtype(dtype).itemsize
    sub = 8 * max(1, 4 // itemsize)
    shape = list(shape)
    if len(shape) >= 1:
        shape[-1] = _round_up(shape[-1], 128)
    if len(shape) >= 2:
        shape[-2] = _round_up(shape[-2], sub)
    n = 1
    for d in shape:
        n *= d
    return n * itemsize


def stacked_lstm_forward(prepped, input_feed, hidden):
    """Mirrors StackedLSTM.forward (eval mode).

    input_feed: (1, B, input_size); hidden: None or (h0, c0) each (L, B, H).
    returns (input_feed_out (1,B,H), (h_1, c_1), i_1, f_1, o_1), stacked (L,B,H).
    """
    W0, Wr, b, D0, H = prepped
    L = b.shape[0]
    B = input_feed.shape[1]

    wdtype = W0.dtype
    sub = 16 if wdtype == jnp.bfloat16 else 8          # bf16 sublane packing
    B_pad = max(sub, _round_up(B, sub))
    Kmax = max(H + D0, 2 * H)
    Wout = _round_up(6 * H, 128)                       # lane-dense packed output width

    if hidden is None:
        h0 = jnp.zeros((L, B, H), jnp.float32)
        c0 = jnp.zeros((L, B, H), jnp.float32)
    else:
        h0, c0 = hidden

    x = input_feed.reshape(B, -1).astype(jnp.float32)  # x.view(x.size(1), -1)
    x = jnp.pad(x, ((0, B_pad - B), (0, 0)))
    hc0 = jnp.concatenate([h0.astype(jnp.float32), c0.astype(jnp.float32)], axis=-1)
    hc0 = jnp.pad(hc0, ((0, 0), (0, B_pad - B), (0, 0)))          # (L, B_pad, 2H)

    # Explicit scoped-VMEM budget from the actual block sizes (+ headroom).
    io_blocks = [
        ((B_pad, D0), jnp.float32),
        ((L, B_pad, 2 * H), jnp.float32),
        (W0.shape, wdtype),
        (Wr.shape, wdtype),
        ((L, 1, 4 * H), jnp.float32),
        ((L, B_pad, Wout), jnp.float32),
    ]
    needed = 2 * sum(_block_bytes(s, d) for s, d in io_blocks)    # double-buffered IO
    needed += _block_bytes((B_pad, Kmax), jnp.float32)            # scratch
    needed += 8 << 20                                             # compiler headroom
    vmem_limit = int(min(max(needed, 16 << 20), 64 << 20))        # v7x-safe cap
    # TODO(synk): for production H on v7x (64 MiB VMEM), tile W along the 4H axis
    #             (grid over 4H//TN) instead of raising the cap.

    packed = pl.pallas_call(
        partial(_stacked_lstm_kernel, hidden_size=H, num_layers=L, in_size=D0),
        out_shape=jax.ShapeDtypeStruct((L, B_pad, Wout), jnp.float32),
        grid_spec=pltpu.PrefetchScalarGridSpec(
            num_scalar_prefetch=0,
            grid=(1,),                                   # whole stack in one step
            in_specs=[
                pl.BlockSpec((B_pad, D0), lambda i: (0, 0)),               # x feed
                pl.BlockSpec((L, B_pad, 2 * H), lambda i: (0, 0, 0)),      # [h0|c0]
                pl.BlockSpec((H + D0, 4 * H), lambda i: (0, 0)),           # W layer 0
                pl.BlockSpec((max(L - 1, 1), 2 * H, 4 * H),
                             lambda i: (0, 0, 0)),                         # W layers 1..
                pl.BlockSpec((L, 1, 4 * H), lambda i: (0, 0, 0)),          # biases
            ],
            out_specs=pl.BlockSpec((L, B_pad, Wout), lambda i: (0, 0, 0)),
            scratch_shapes=[pltpu.VMEM((B_pad, Kmax), jnp.float32)],
        ),
        compiler_params=pltpu.CompilerParams(
            dimension_semantics=("arbitrary",),
            vmem_limit_bytes=vmem_limit),
    )(x, hc0, W0, Wr, b)

    packed = packed[:, :B, :]            # drop padded batch rows + garbage pad lanes
    i_1 = packed[:, :, 0 * H:1 * H]
    f_1 = packed[:, :, 1 * H:2 * H]
    o_1 = packed[:, :, 2 * H:3 * H]
    h_1 = packed[:, :, 4 * H:5 * H]
    c_1 = packed[:, :, 5 * H:6 * H]
    input_feed_out = h_1[-1][None, :, :]
    # TODO(synk): nn.Dropout between layers is training-mode only; eval path is identity.
    # TODO(synk): for autoregressive decode, wrap a time axis around the layer loop
    #             (grid=(T,)) with input_output_aliases on h/c so weights stay
    #             VMEM-resident across tokens; the module forward is single-step.
    return input_feed_out, (h_1, c_1), i_1, f_1, o_1


def stacked_lstm_reference(params, input_feed, hidden, rnn_size):
    """Pure-JAX mirror of the PyTorch module for correctness checking."""
    L = len(params)
    B = input_feed.shape[1]
    H = rnn_size
    if hidden is None:
        h0 = jnp.zeros((L, B, H), jnp.float32)
        c0 = jnp.zeros((L, B, H), jnp.float32)
    else:
        h0, c0 = hidden
    x = input_feed.reshape(B, -1)
    hs, cs, is_, fs, os_ = [], [], [], [], []
    hp = jax.lax.Precision.HIGHEST
    for l, (wi, wh, bi, bh) in enumerate(params):
        preact = (jnp.dot(x, wi.T, precision=hp) + bi
                  + jnp.dot(h0[l], wh.T, precision=hp) + bh)
        gates = jax.nn.sigmoid(preact[:, :3 * H])
        g_t = jnp.tanh(preact[:, 3 * H:])
        i_t = gates[:, :H]
        f_t = gates[:, H:2 * H]
        o_t = gates[:, 2 * H:]
        c_t = c0[l] * f_t + i_t * g_t
        h_t = o_t * jnp.tanh(c_t)
        x = h_t
        hs.append(h_t); cs.append(c_t); is_.append(i_t); fs.append(f_t); os_.append(o_t)
    return (x[None], (jnp.stack(hs), jnp.stack(cs)),
            jnp.stack(is_), jnp.stack(fs), jnp.stack(os_))


if __name__ == "__main__":
    num_layers = 2
    input_size = 16
    rnn_size = 32
    batch = 2

    key = jax.random.PRNGKey(0)
    key, kp, kx, kh, kc = jax.random.split(key, 5)

    params = init_stacked_lstm_params(kp, num_layers, input_size, rnn_size)

    input_feed = jax.random.normal(kx, (1, batch, input_size), jnp.float32)
    h0 = jax.random.normal(kh, (num_layers, batch, rnn_size), jnp.float32)
    c0 = jax.random.normal(kc, (num_layers, batch, rnn_size), jnp.float32)

    r_feed, (rh, rc), ri, rf, ro = stacked_lstm_reference(
        params, input_feed, (h0, c0), rnn_size)

    # --- f32 weights ---------------------------------------------------------
    prepped_f32 = prep_stacked_params(params, input_size, rnn_size, jnp.float32)
    out = stacked_lstm_forward(prepped_f32, input_feed, (h0, c0))
    jax.block_until_ready(out)
    out_feed, (h1, c1), i1, f1, o1 = out

    assert out_feed.shape == (1, batch, rnn_size)
    for t in (h1, c1, i1, f1, o1):
        assert t.shape == (num_layers, batch, rnn_size)

    for got, ref in ((out_feed, r_feed), (h1, rh), (c1, rc),
                     (i1, ri), (f1, rf), (o1, ro)):
        err = float(jnp.max(jnp.abs(got - ref)))
        assert jnp.allclose(got, ref, atol=1e-2, rtol=1e-2), err

    # --- bf16 weights (v6e/v7x weight-DMA path), f32 gate math ---------------
    prepped_bf16 = prep_stacked_params(params, input_size, rnn_size, jnp.bfloat16)
    out_b = stacked_lstm_forward(prepped_bf16, input_feed, (h0, c0))
    jax.block_until_ready(out_b)
    out_feed_b, (h1b, c1b), i1b, f1b, o1b = out_b
    for got, ref in ((out_feed_b, r_feed), (h1b, rh), (c1b, rc),
                     (i1b, ri), (f1b, rf), (o1b, ro)):
        err = float(jnp.max(jnp.abs(got - ref)))
        assert jnp.allclose(got, ref, atol=5e-2, rtol=5e-2), err

    # hidden=None path (zero initial state), as in the module
    out2 = stacked_lstm_forward(prepped_f32, input_feed, None)
    jax.block_until_ready(out2)

    print("KERNEL_OK")
</pallas_src>

<mosaic_0001>
module attributes {stable_mosaic.version = 11 : i64} {
  func.func @_stacked_lstm_kernel(%arg0: i32, %arg1: memref<8x16xf32, #tpu.memory_space<vmem>>, %arg2: memref<2x8x64xf32, #tpu.memory_space<vmem>>, %arg3: memref<48x128xf32, #tpu.memory_space<vmem>>, %arg4: memref<1x64x128xf32, #tpu.memory_space<vmem>>, %arg5: memref<2x1x128xf32, #tpu.memory_space<vmem>>, %arg6: memref<2x8x256xf32, #tpu.memory_space<vmem>>, %arg7: memref<8x64xf32, #tpu.memory_space<vmem>>) attributes {dimension_semantics = [#tpu.dimension_semantics<arbitrary>], iteration_bounds = array<i64: 1>, scalar_prefetch = 0 : i64, scratch_operands = 1 : i64, tpu.core_type = #tpu.core_type<tc>, window_params = [{pipeline_mode = #tpu.pipeline_mode<synchronous>, transform_indices = @transform_0, window_bounds = array<i64: 8, 16>}, {pipeline_mode = #tpu.pipeline_mode<synchronous>, transform_indices = @transform_1, window_bounds = array<i64: 2, 8, 64>}, {pipeline_mode = #tpu.pipeline_mode<synchronous>, transform_indices = @transform_2, window_bounds = array<i64: 48, 128>}, {pipeline_mode = #tpu.pipeline_mode<synchronous>, transform_indices = @transform_3, window_bounds = array<i64: 1, 64, 128>}, {pipeline_mode = #tpu.pipeline_mode<synchronous>, transform_indices = @transform_4, window_bounds = array<i64: 2, 1, 128>}, {pipeline_mode = #tpu.pipeline_mode<synchronous>, transform_indices = @transform_5, window_bounds = array<i64: 2, 8, 256>}]} {
    %0 = tpu.iota {dimensions = array<i32: 1>} : vector<8x128xi32>
    %c96_i32 = arith.constant 96 : i32
    %1 = vector.broadcast %c96_i32 : i32 to vector<8x128xi32>
    %2 = arith.cmpi slt, %0, %1 : vector<8x128xi32>
    %c0 = arith.constant 0 : index
    %c0_0 = arith.constant 0 : index
    %3 = vector.load %arg1[%c0, %c0_0] : memref<8x16xf32, #tpu.memory_space<vmem>>, vector<8x16xf32>
    %c0_1 = arith.constant 0 : index
    %c32 = arith.constant 32 : index
    %4 = vector.load %arg7[%c0_1, %c32] : memref<8x64xf32, #tpu.memory_space<vmem>>, vector<8x16xf32>
    tpu.vector_store %arg7[%c0_1, %c32], %3 {strides = array<i32>} : memref<8x64xf32, #tpu.memory_space<vmem>>, vector<8x16xf32>,
    %c0_2 = arith.constant 0 : index
    %c0_3 = arith.constant 0 : index
    %c0_4 = arith.constant 0 : index
    %5 = vector.load %arg2[%c0_2, %c0_3, %c0_4] : memref<2x8x64xf32, #tpu.memory_space<vmem>>, vector<1x8x64xf32>
    %6 = vector.shape_cast %5 : vector<1x8x64xf32> to vector<8x64xf32>
    %7 = vector.extract_strided_slice %6 {offsets = [0, 0], sizes = [8, 32], strides = [1, 1]} : vector<8x64xf32> to vector<8x32xf32>
    %c0_5 = arith.constant 0 : index
    %c0_6 = arith.constant 0 : index
    %8 = vector.load %arg7[%c0_5, %c0_6] : memref<8x64xf32, #tpu.memory_space<vmem>>, vector<8x32xf32>
    tpu.vector_store %arg7[%c0_5, %c0_6], %7 {strides = array<i32>} : memref<8x64xf32, #tpu.memory_space<vmem>>, vector<8x32xf32>,
    %9 = vector.extract_strided_slice %6 {offsets = [0, 32], sizes = [8, 32], strides = [1, 1]} : vector<8x64xf32> to vector<8x32xf32>
    %c0_7 = arith.constant 0 : index
    %c0_8 = arith.constant 0 : index
    %10 = vector.load %arg3[%c0_7, %c0_8] : memref<48x128xf32, #tpu.memory_space<vmem>>, vector<48x128xf32>
    %c0_9 = arith.constant 0 : index
    %c0_10 = arith.constant 0 : index
    %11 = vector.load %arg7[%c0_9, %c0_10] : memref<8x64xf32, #tpu.memory_space<vmem>>, vector<8x48xf32>
    %cst = arith.constant dense<0.000000e+00> : vector<8x128xf32>
    %12 = tpu.matmul %11, %10, %cst {dimension_numbers = #tpu.dot_dimension_numbers<[1], [0], [0], [1], [0, 0, 1, 1], [], []>} : vector<8x48xf32>, vector<48x128xf32>, vector<8x128xf32> -> vector<8x128xf32>
    %c0_11 = arith.constant 0 : index
    %c0_12 = arith.constant 0 : index
    %c0_13 = arith.constant 0 : index
    %13 = vector.load %arg5[%c0_11, %c0_12, %c0_13] : memref<2x1x128xf32, #tpu.memory_space<vmem>>, vector<1x1x128xf32>
    %14 = vector.shape_cast %13 : vector<1x1x128xf32> to vector<1x128xf32>
    %15 = vector.broadcast %14 : vector<1x128xf32> to vector<8x128xf32>
    %16 = arith.addf %12, %15 : vector<8x128xf32>
    %17 = arith.addf %16, %16 : vector<8x128xf32>
    %18 = arith.select %2, %16, %17 : vector<8x128xi1>, vector<8x128xf32>
    %19 = arith.negf %18 : vector<8x128xf32>
    %20 = math.exp %19 : vector<8x128xf32>
    %cst_14 = arith.constant 1.000000e+00 : f32
    %21 = vector.broadcast %cst_14 : f32 to vector<8x128xf32>
    %22 = arith.addf %21, %20 : vector<8x128xf32>
    %23 = arith.divf %21, %22 : vector<8x128xf32>
    %24 = arith.addf %23, %23 : vector<8x128xf32>
    %cst_15 = arith.constant 1.000000e+00 : f32
    %25 = vector.broadcast %cst_15 : f32 to vector<8x128xf32>
    %26 = arith.subf %24, %25 : vector<8x128xf32>
    %27 = arith.select %2, %23, %26 : vector<8x128xi1>, vector<8x128xf32>
    %28 = vector.extract_strided_slice %27 {offsets = [0, 0], sizes = [8, 32], strides = [1, 1]} : vector<8x128xf32> to vector<8x32xf32>
    %29 = vector.extract_strided_slice %27 {offsets = [0, 32], sizes = [8, 32], strides = [1, 1]} : vector<8x128xf32> to vector<8x32xf32>
    %30 = vector.extract_strided_slice %27 {offsets = [0, 64], sizes = [8, 32], strides = [1, 1]} : vector<8x128xf32> to vector<8x32xf32>
    %31 = vector.extract_strided_slice %27 {offsets = [0, 96], sizes = [8, 32], strides = [1, 1]} : vector<8x128xf32> to vector<8x32xf32>
    %32 = arith.mulf %29, %9 : vector<8x32xf32>
    %33 = arith.mulf %28, %31 : vector<8x32xf32>
    %34 = arith.addf %32, %33 : vector<8x32xf32>
    %35 = math.tanh %34 : vector<8x32xf32>
    %36 = arith.mulf %30, %35 : vector<8x32xf32>
    %c0_16 = arith.constant 0 : index
    %c0_17 = arith.constant 0 : index
    %c0_18 = arith.constant 0 : index
    %37 = vector.load %arg6[%c0_16, %c0_17, %c0_18] : memref<2x8x256xf32, #tpu.memory_space<vmem>>, vector<1x8x128xf32>
    %38 = vector.shape_cast %37 : vector<1x8x128xf32> to vector<8x128xf32>
    %39 = vector.shape_cast %27 : vector<8x128xf32> to vector<1x8x128xf32>
    tpu.vector_store %arg6[%c0_16, %c0_17, %c0_18], %39 {strides = array<i32>} : memref<2x8x256xf32, #tpu.memory_space<vmem>>, vector<1x8x128xf32>,
    %c0_19 = arith.constant 0 : index
    %c0_20 = arith.constant 0 : index
    %c128 = arith.constant 128 : index
    %40 = vector.load %arg6[%c0_19, %c0_20, %c128] : memref<2x8x256xf32, #tpu.memory_space<vmem>>, vector<1x8x32xf32>
    %41 = vector.shape_cast %40 : vector<1x8x32xf32> to vector<8x32xf32>
    %42 = vector.shape_cast %36 : vector<8x32xf32> to vector<1x8x32xf32>
    tpu.vector_store %arg6[%c0_19, %c0_20, %c128], %42 {strides = array<i32>} : memref<2x8x256xf32, #tpu.memory_space<vmem>>, vector<1x8x32xf32>,
    %c0_21 = arith.constant 0 : index
    %c0_22 = arith.constant 0 : index
    %c160 = arith.constant 160 : index
    %43 = vector.load %arg6[%c0_21, %c0_22, %c160] : memref<2x8x256xf32, #tpu.memory_space<vmem>>, vector<1x8x32xf32>
    %44 = vector.shape_cast %43 : vector<1x8x32xf32> to vector<8x32xf32>
    %45 = vector.shape_cast %34 : vector<8x32xf32> to vector<1x8x32xf32>
    tpu.vector_store %arg6[%c0_21, %c0_22, %c160], %45 {strides = array<i32>} : memref<2x8x256xf32, #tpu.memory_space<vmem>>, vector<1x8x32xf32>,
    %c0_23 = arith.constant 0 : index
    %c32_24 = arith.constant 32 : index
    %46 = vector.load %arg7[%c0_23, %c32_24] : memref<8x64xf32, #tpu.memory_space<vmem>>, vector<8x32xf32>
    tpu.vector_store %arg7[%c0_23, %c32_24], %36 {strides = array<i32>} : memref<8x64xf32, #tpu.memory_space<vmem>>, vector<8x32xf32>,
    %c1 = arith.constant 1 : index
    %c0_25 = arith.constant 0 : index
    %c0_26 = arith.constant 0 : index
    %47 = vector.load %arg2[%c1, %c0_25, %c0_26] : memref<2x8x64xf32, #tpu.memory_space<vmem>>, vector<1x8x64xf32>
    %48 = vector.shape_cast %47 : vector<1x8x64xf32> to vector<8x64xf32>
    %49 = vector.extract_strided_slice %48 {offsets = [0, 0], sizes = [8, 32], strides = [1, 1]} : vector<8x64xf32> to vector<8x32xf32>
    %c0_27 = arith.constant 0 : index
    %c0_28 = arith.constant 0 : index
    %50 = vector.load %arg7[%c0_27, %c0_28] : memref<8x64xf32, #tpu.memory_space<vmem>>, vector<8x32xf32>
    tpu.vector_store %arg7[%c0_27, %c0_28], %49 {strides = array<i32>} : memref<8x64xf32, #tpu.memory_space<vmem>>, vector<8x32xf32>,
    %51 = vector.extract_strided_slice %48 {offsets = [0, 32], sizes = [8, 32], strides = [1, 1]} : vector<8x64xf32> to vector<8x32xf32>
    %c0_29 = arith.constant 0 : index
    %c0_30 = arith.constant 0 : index
    %c0_31 = arith.constant 0 : index
    %52 = vector.load %arg4[%c0_29, %c0_30, %c0_31] : memref<1x64x128xf32, #tpu.memory_space<vmem>>, vector<1x64x128xf32>
    %53 = vector.shape_cast %52 : vector<1x64x128xf32> to vector<64x128xf32>
    %c0_32 = arith.constant 0 : index
    %c0_33 = arith.constant 0 : index
    %54 = vector.load %arg7[%c0_32, %c0_33] : memref<8x64xf32, #tpu.memory_space<vmem>>, vector<8x64xf32>
    %cst_34 = arith.constant dense<0.000000e+00> : vector<8x128xf32>
    %55 = tpu.matmul %54, %53, %cst_34 {dimension_numbers = #tpu.dot_dimension_numbers<[1], [0], [0], [1], [0, 0, 1, 1], [], []>} : vector<8x64xf32>, vector<64x128xf32>, vector<8x128xf32> -> vector<8x128xf32>
    %c1_35 = arith.constant 1 : index
    %c0_36 = arith.constant 0 : index
    %c0_37 = arith.constant 0 : index
    %56 = vector.load %arg5[%c1_35, %c0_36, %c0_37] : memref<2x1x128xf32, #tpu.memory_space<vmem>>, vector<1x1x128xf32>
    %57 = vector.shape_cast %56 : vector<1x1x128xf32> to vector<1x128xf32>
    %58 = vector.broadcast %57 : vector<1x128xf32> to vector<8x128xf32>
    %59 = arith.addf %55, %58 : vector<8x128xf32>
    %60 = arith.addf %59, %59 : vector<8x128xf32>
    %61 = arith.select %2, %59, %60 : vector<8x128xi1>, vector<8x128xf32>
    %62 = arith.negf %61 : vector<8x128xf32>
    %63 = math.exp %62 : vector<8x128xf32>
    %cst_38 = arith.constant 1.000000e+00 : f32
    %64 = vector.broadcast %cst_38 : f32 to vector<8x128xf32>
    %65 = arith.addf %64, %63 : vector<8x128xf32>
    %66 = arith.divf %64, %65 : vector<8x128xf32>
    %67 = arith.addf %66, %66 : vector<8x128xf32>
    %cst_39 = arith.constant 1.000000e+00 : f32
    %68 = vector.broadcast %cst_39 : f32 to vector<8x128xf32>
    %69 = arith.subf %67, %68 : vector<8x128xf32>
    %70 = arith.select %2, %66, %69 : vector<8x128xi1>, vector<8x128xf32>
    %71 = vector.extract_strided_slice %70 {offsets = [0, 0], sizes = [8, 32], strides = [1, 1]} : vector<8x128xf32> to vector<8x32xf32>
    %72 = vector.extract_strided_slice %70 {offsets = [0, 32], sizes = [8, 32], strides = [1, 1]} : vector<8x128xf32> to vector<8x32xf32>
    %73 = vector.extract_strided_slice %70 {offsets = [0, 64], sizes = [8, 32], strides = [1, 1]} : vector<8x128xf32> to vector<8x32xf32>
    %74 = vector.extract_strided_slice %70 {offsets = [0, 96], sizes = [8, 32], strides = [1, 1]} : vector<8x128xf32> to vector<8x32xf32>
    %75 = arith.mulf %72, %51 : vector<8x32xf32>
    %76 = arith.mulf %71, %74 : vector<8x32xf32>
    %77 = arith.addf %75, %76 : vector<8x32xf32>
    %78 = math.tanh %77 : vector<8x32xf32>
    %79 = arith.mulf %73, %78 : vector<8x32xf32>
    %c1_40 = arith.constant 1 : index
    %c0_41 = arith.constant 0 : index
    %c0_42 = arith.constant 0 : index
    %80 = vector.load %arg6[%c1_40, %c0_41, %c0_42] : memref<2x8x256xf32, #tpu.memory_space<vmem>>, vector<1x8x128xf32>
    %81 = vector.shape_cast %80 : vector<1x8x128xf32> to vector<8x128xf32>
    %82 = vector.shape_cast %70 : vector<8x128xf32> to vector<1x8x128xf32>
    tpu.vector_store %arg6[%c1_40, %c0_41, %c0_42], %82 {strides = array<i32>} : memref<2x8x256xf32, #tpu.memory_space<vmem>>, vector<1x8x128xf32>,
    %c1_43 = arith.constant 1 : index
    %c0_44 = arith.constant 0 : index
    %c128_45 = arith.constant 128 : index
    %83 = vector.load %arg6[%c1_43, %c0_44, %c128_45] : memref<2x8x256xf32, #tpu.memory_space<vmem>>, vector<1x8x32xf32>
    %84 = vector.shape_cast %83 : vector<1x8x32xf32> to vector<8x32xf32>
    %85 = vector.shape_cast %79 : vector<8x32xf32> to vector<1x8x32xf32>
    tpu.vector_store %arg6[%c1_43, %c0_44, %c128_45], %85 {strides = array<i32>} : memref<2x8x256xf32, #tpu.memory_space<vmem>>, vector<1x8x32xf32>,
    %c1_46 = arith.constant 1 : index
    %c0_47 = arith.constant 0 : index
    %c160_48 = arith.constant 160 : index
    %86 = vector.load %arg6[%c1_46, %c0_47, %c160_48] : memref<2x8x256xf32, #tpu.memory_space<vmem>>, vector<1x8x32xf32>
    %87 = vector.shape_cast %86 : vector<1x8x32xf32> to vector<8x32xf32>
    %88 = vector.shape_cast %77 : vector<8x32xf32> to vector<1x8x32xf32>
    tpu.vector_store %arg6[%c1_46, %c0_47, %c160_48], %88 {strides = array<i32>} : memref<2x8x256xf32, #tpu.memory_space<vmem>>, vector<1x8x32xf32>,
    return
  }
  func.func @transform_0(%arg0: i32) -> (i32, i32) {
    %c0_i32 = arith.constant 0 : i32
    %c0_i32_0 = arith.constant 0 : i32
    %c0_i32_1 = arith.constant 0 : i32
    return %c0_i32, %c0_i32_0 : i32, i32
  }
  func.func @transform_1(%arg0: i32) -> (i32, i32, i32) {
    %c0_i32 = arith.constant 0 : i32
    %c0_i32_0 = arith.constant 0 : i32
    %c0_i32_1 = arith.constant 0 : i32
    %c0_i32_2 = arith.constant 0 : i32
    return %c0_i32, %c0_i32_0, %c0_i32_1 : i32, i32, i32
  }
  func.func @transform_2(%arg0: i32) -> (i32, i32) {
    %c0_i32 = arith.constant 0 : i32
    %c0_i32_0 = arith.constant 0 : i32
    %c0_i32_1 = arith.constant 0 : i32
    return %c0_i32, %c0_i32_0 : i32, i32
  }
  func.func @transform_3(%arg0: i32) -> (i32, i32, i32) {
    %c0_i32 = arith.constant 0 : i32
    %c0_i32_0 = arith.constant 0 : i32
    %c0_i32_1 = arith.constant 0 : i32
    %c0_i32_2 = arith.constant 0 : i32
    return %c0_i32, %c0_i32_0, %c0_i32_1 : i32, i32, i32
  }
  func.func @transform_4(%arg0: i32) -> (i32, i32, i32) {
    %c0_i32 = arith.constant 0 : i32
    %c0_i32_0 = arith.constant 0 : i32
    %c0_i32_1 = arith.constant 0 : i32
    %c0_i32_2 = arith.constant 0 : i32
    return %c0_i32, %c0_i32_0, %c0_i32_1 : i32, i32, i32
  }
  func.func @transform_5(%arg0: i32) -> (i32, i32, i32) {
    %c0_i32 = arith.constant 0 : i32
    %c0_i32_0 = arith.constant 0 : i32
    %c0_i32_1 = arith.constant 0 : i32
    %c0_i32_2 = arith.constant 0 : i32
    return %c0_i32, %c0_i32_0, %c0_i32_1 : i32, i32, i32
  }
}

</mosaic_0001>

<llo_original>
// kernel: tpu_custom_call.1
$region0: #{tpu_custom_call.1}
  #allocation0 [shape = 'u32[]', space=smem, size = 0x4, offset = 0x4, fixed_abs, tag = 'smem constant byte address 0x4 - core index']
  #allocation1 [shape = 'u32[72,128]{1,0:T(1,128)}', space=vmem, size = 0x9000, scoped, tag = 'internal scratch']
  #allocation2 [shape = 'f32[8,64]{1,0:T(8,128)}', space=vmem, size = 0x1000, scoped, tag = 'scratch operand']
  %s0 = inlined_call_operand.hbm [shape: f32[8,16], index: 0, kind: input, shape index: {}]
  %s1 = inlined_call_operand.hbm [shape: f32[2,8,64], index: 1, kind: input, shape index: {}]
  %s2 = inlined_call_operand.hbm [shape: f32[48,128], index: 2, kind: input, shape index: {}]
  %s3 = inlined_call_operand.hbm [shape: f32[1,64,128], index: 3, kind: input, shape index: {}]
  %s4 = inlined_call_operand.vmem [shape: f32[2,1,128], index: 4, kind: input, shape index: {}]
  %s5 = inlined_call_operand.hbm [shape: f32[2,8,256], index: 5, kind: output, shape index: {}]
  %s6 = sld [smem:[#allocation0]]
  $region46: #{tpu_custom_call.1} parent=0
    _
  %s8 = ssub.s32 1, %s6
  %s9 = scalar_select 0, %s8, %s6
  $region1: #{tpu_custom_call.1} parent=0
    #allocation3 [shape = 'u8[4096]{0}', space=vmem, size = 0x1000, scoped, tag = 'input window, operand 0, single buffered']
    #allocation4 [shape = 's32[1]{0}', space=sflag, size = 0x4, scoped, tag = 'scoped memory for tpu_custom_call.1']
    #allocation5 [shape = 's32[1]{0}', space=sflag, size = 0x4, scoped, tag = 'scoped memory for tpu_custom_call.1']
    #allocation6 [shape = 'u8[8192]{0}', space=vmem, size = 0x2000, scoped, tag = 'input window, operand 1, single buffered']
    #allocation7 [shape = 's32[1]{0}', space=sflag, size = 0x4, scoped, tag = 'scoped memory for tpu_custom_call.1']
    #allocation8 [shape = 'u8[24576]{0}', space=vmem, size = 0x6000, scoped, tag = 'input window, operand 2, single buffered']
    #allocation9 [shape = 'u8[32768]{0}', space=vmem, size = 0x8000, scoped, tag = 'input window, operand 3, single buffered']
    #allocation10 [shape = 's32[1]{0}', space=sflag, size = 0x4, scoped, tag = 'scoped memory for tpu_custom_call.1']
    #allocation11 [shape = 'u8[16384]{0}', space=vmem, size = 0x4000, scoped, tag = 'output window, operand 0, single buffered']
    %10 = vsyncpa [#allocation4], 0
    %11 = vsyncpa [#allocation7], 0
    %12 = vsyncpa [#allocation10], 0
    %13 = vsyncpa [#allocation5], 0
    // Predicated region
    $region2: #{tpu_custom_call.1} parent=1 // pred_check
      _
    $region3: #{tpu_custom_call.1} parent=1 // pred_check_branch
      %15 = sbr.rel (0) target = $region5
    $region4: #{tpu_custom_call.1} parent=1 // pred_region
      %17 = vsyncadd [#allocation4], 0
      %s19 = sshll.u32 %s0, 4
      %s20 = int_to_ptr.hbm [resolvable:$true] %s19
      %s21 = sshll.u32 [#allocation3], 4
      %s22 = int_to_ptr.vmem [resolvable:$true] %s21
      %24 = dma.hbm_to_vmem [thread:$0]  %s20, 128, %s22, [#allocation4]
    $region5: #{tpu_custom_call.1} parent=1 // pred_fallthru
      _
    // Predicated region
    $region6: #{tpu_custom_call.1} parent=1 // pred_check
      _
    $region7: #{tpu_custom_call.1} parent=1 // pred_check_branch
      %26 = sbr.rel (0) target = $region9
    $region8: #{tpu_custom_call.1} parent=1 // pred_region
      %28 = vsyncadd [#allocation7], 0
      %s29 = sshll.u32 %s1, 4
      %s30 = int_to_ptr.hbm [resolvable:$true] %s29
      %s31 = sshll.u32 [#allocation6], 4
      %s32 = int_to_ptr.vmem [resolvable:$true] %s31
      %37 = dma.hbm_to_vmem [thread:$0]  %s30, 256, %s32, [#allocation7], 128, 128, 8
    $region9: #{tpu_custom_call.1} parent=1 // pred_fallthru
      _
    // Predicated region
    $region10: #{tpu_custom_call.1} parent=1 // pred_check
      _
    $region11: #{tpu_custom_call.1} parent=1 // pred_check_branch
      %39 = sbr.rel (0) target = $region13
    $region12: #{tpu_custom_call.1} parent=1 // pred_region
      %41 = vsyncadd [#allocation7], 0
      %s42 = sshll.u32 %s2, 4
      %s43 = int_to_ptr.hbm [resolvable:$true] %s42
      %s44 = sshll.u32 [#allocation8], 4
      %s45 = int_to_ptr.vmem [resolvable:$true] %s44
      %50 = dma.hbm_to_vmem [thread:$0]  %s43, 768, %s45, [#allocation7], 128, 128, 8
    $region13: #{tpu_custom_call.1} parent=1 // pred_fallthru
      _
    // Predicated region
    $region14: #{tpu_custom_call.1} parent=1 // pred_check
      _
    $region15: #{tpu_custom_call.1} parent=1 // pred_check_branch
      %52 = sbr.rel (0) target = $region17
    $region16: #{tpu_custom_call.1} parent=1 // pred_region
      %54 = vsyncadd [#allocation10], 0
      %s55 = sshll.u32 %s3, 4
      %s56 = int_to_ptr.hbm [resolvable:$true] %s55
      %s57 = sshll.u32 [#allocation9], 4
      %s58 = int_to_ptr.vmem [resolvable:$true] %s57
      %63 = dma.hbm_to_vmem [thread:$0]  %s56, 1024, %s58, [#allocation10], 128, 128, 8
    $region17: #{tpu_custom_call.1} parent=1 // pred_fallthru
      _
    // Predicated region
    $region18: #{tpu_custom_call.1} parent=1 // pred_check
      _
    $region19: #{tpu_custom_call.1} parent=1 // pred_check_branch
      %65 = sbr.rel (0) target = $region21
    $region20: #{tpu_custom_call.1} parent=1 // pred_region
      _
    $region21: #{tpu_custom_call.1} parent=1 // pred_fallthru
      _
    // Predicated region
    $region22: #{tpu_custom_call.1} parent=1 // pred_check
      _
    $region23: #{tpu_custom_call.1} parent=1 // pred_check_branch
      %67 = sbr.rel (0) target = $region25
    $region24: #{tpu_custom_call.1} parent=1 // pred_region
      %69 = dma.done [#allocation4], 128
    $region25: #{tpu_custom_call.1} parent=1 // pred_fallthru
      _
    // Predicated region
    $region26: #{tpu_custom_call.1} parent=1 // pred_check
      _
    $region27: #{tpu_custom_call.1} parent=1 // pred_check_branch
      %71 = sbr.rel (0) target = $region29
    $region28: #{tpu_custom_call.1} parent=1 // pred_region
      %73 = dma.done [#allocation7], 256
    $region29: #{tpu_custom_call.1} parent=1 // pred_fallthru
      _
    // Predicated region
    $region30: #{tpu_custom_call.1} parent=1 // pred_check
      _
    $region31: #{tpu_custom_call.1} parent=1 // pred_check_branch
      %75 = sbr.rel (0) target = $region33
    $region32: #{tpu_custom_call.1} parent=1 // pred_region
      %77 = dma.done [#allocation7], 768
    $region33: #{tpu_custom_call.1} parent=1 // pred_fallthru
      _
    // Predicated region
    $region34: #{tpu_custom_call.1} parent=1 // pred_check
      _
    $region35: #{tpu_custom_call.1} parent=1 // pred_check_branch
      %79 = sbr.rel (0) target = $region37
    $region36: #{tpu_custom_call.1} parent=1 // pred_region
      %81 = dma.done [#allocation10], 1024
    $region37: #{tpu_custom_call.1} parent=1 // pred_fallthru
      _
    %v82 = vlaneseq
    %v83 = vand.u32 %v82, 127
    %vm84 = vcmp.lt.s32.totalorder %v83, 96
    %v85 = vld [vmem:[#allocation3] sm:$0xff]
    %87 = vrot.lane.b32.xlu0 %v85, 32
    %v88 = vpop.permute.xlu0 %87
    %vm90 = vcmask 392448
    %91 = vst.msk [vmem:[#allocation2] sm:$0xff] %vm90, %v88
    %v92 = vld [vmem:[#allocation6] sm:$0xff]
    %vm93 = vcmask 261120
    %94 = vst.msk [vmem:[#allocation2] sm:$0xff] %vm93, %v92
    %v95 = vld [vmem:[#allocation8] sm:$0xff]
    %v96 = vld [vmem:[#allocation8 + $0x8] sm:$0xff]
    %v97 = vld [vmem:[#allocation8 + $0x10] sm:$0xff]
    %v98 = vld [vmem:[#allocation8 + $0x18] sm:$0xff]
    %v99 = vld [vmem:[#allocation8 + $0x20] sm:$0xff]
    %v100 = vld [vmem:[#allocation8 + $0x28] sm:$0xff]
    %v101 = vld [vmem:[#allocation2] sm:$0xff]
    %v102 = vld [vmem:[%s4] sm:$0x1]
    %v104 = vperm.slane %v102, 0
    %vm106 = vcmask 392192
    %v108 = vsel %vm106, %v101, 0
    %110 = vmatpush.msra.mxu0 0.0
    %111 = vmatpush.msra.mxu0 0.0
    %112 = vmatpush.msra.mxu0 0.0
    %113 = vmatpush.msra.mxu0 0.0
    %114 = vmatpush.msra.mxu0 0.0
    %115 = vmatpush.msra.mxu0 0.0
    %116 = vmatpush.msra.mxu0 0.0
    %117 = vmatpush.msra.mxu0 0.0
    %118 = vmatpush.msra.mxu0 0.0
    %119 = vmatpush.msra.mxu0 0.0
    %120 = vmatpush.msra.mxu0 %v100
    %121 = vmatpush.msra.mxu0 %v99
    %122 = vmatpush.msra.mxu0 %v98
    %123 = vmatpush.msra.mxu0 %v97
    %124 = vmatpush.msra.mxu0 %v96
    %125 = vmatpush.msra.mxu0 %v95
    %126 = vmatmul.f32.gmra.mxu0 %v108
    %v127 = vpop.f32.mrf.mxu0
    %v128 = vadd.f32 %v104, %v127
    %129 = vdwg.mxu0
    %v130 = vadd.f32 %v128, %v128
    %v131 = vsel %vm84, %v128, %v130
    %v132 = vxor.u32 %v131, 2147483648
    %v133 = vmul.f32 %v132, 1.442695
    %v134 = vpow.pop %v133
    %v135 = vadd.f32 %v134, 1.0
    %v136 = vrcp.pop %v135
    %v137 = vmul.f32 %v135, %v136
    %v138 = vsub.f32 1.0, %v137
    %v139 = vmul.f32 %v136, %v138
    %v140 = vadd.f32 %v136, %v139
    %vm141 = vweird.f32 %v135
    %vm142 = vweird.f32 %v136
    %vm143 = vmor %vm141, %vm142
    %v144 = vsel %vm143, %v136, %v140
    %v145 = vand.u32 2147483647, %v135
    %vm146 = vcmp.eq.f32.partialorder %v145, 8.507059e+37
    %v147 = vand.u32 %v135, 2147483648
    %v148 = vor.u32 1.1754944e-38, %v147
    %v149 = vsel %vm146, %v148, %v144
    %v150 = vmul.f32 1.0, %v149
    %v151 = vadd.f32 %v150, %v150
    %v152 = vsub.f32 %v151, 1.0
    %v153 = vsel %vm84, %v150, %v152
    %v154 = vmul.f32 %v153, %v92
    %156 = vrot.lane.b32.xlu0 %v153, 32
    %v157 = vpop.permute.xlu0 %156
    %v159 = vmul.f32 %v153, %v157
    %161 = vrot.lane.b32.xlu0 %v159, 32
    %v162 = vpop.permute.xlu0 %161
    %v164 = vadd.f32 %v154, %v162
    %v165 = vtanh.pop %v164
    %167 = vrot.lane.b32.xlu0 %v165, 32
    %v168 = vpop.permute.xlu0 %167
    %v170 = vmul.f32 %v153, %v168
    %171 = vst [vmem:[#allocation11] sm:$0xff] %v153
    %173 = vrot.lane.b32.xlu0 %v170, 64
    %v174 = vpop.permute.xlu0 %173
    %176 = vst.msk [vmem:[#allocation11 + $0x8] sm:$0xff] %vm93, %v174
    %vm177 = vcmask 523520
    %178 = vst.msk [vmem:[#allocation11 + $0x8] sm:$0xff] %vm177, %v164
    %179 = vrot.lane.b32.xlu0 %v170, 96
    %v180 = vpop.permute.xlu0 %179
    %182 = vst.msk [vmem:[#allocation2] sm:$0xff] %vm177, %v180
    %s183 = scalar_lea.vmem [#allocation6], 8
    %v184 = vld [vmem:[%s183] sm:$0xff]
    %185 = vst.msk [vmem:[#allocation2] sm:$0xff] %vm93, %v184
    %v186 = vld [vmem:[#allocation9] sm:$0xff]
    %v187 = vld [vmem:[#allocation9 + $0x8] sm:$0xff]
    %v188 = vld [vmem:[#allocation9 + $0x10] sm:$0xff]
    %v189 = vld [vmem:[#allocation9 + $0x18] sm:$0xff]
    %v190 = vld [vmem:[#allocation9 + $0x20] sm:$0xff]
    %v191 = vld [vmem:[#allocation9 + $0x28] sm:$0xff]
    %v192 = vld [vmem:[#allocation9 + $0x30] sm:$0xff]
    %v193 = vld [vmem:[#allocation9 + $0x38] sm:$0xff]
    %v194 = vld [vmem:[#allocation2] sm:$0xff]
    %s195 = scalar_lea.vmem %s4, 1
    %v196 = vld [vmem:[%s195] sm:$0x1]
    %v198 = vperm.slane %v196, 0
    %vm200 = vcmask 523264
    %v202 = vsel %vm200, %v194, 0
    %204 = vmatpush.msra.mxu0 0.0
    %205 = vmatpush.msra.mxu0 0.0
    %206 = vmatpush.msra.mxu0 0.0
    %207 = vmatpush.msra.mxu0 0.0
    %208 = vmatpush.msra.mxu0 0.0
    %209 = vmatpush.msra.mxu0 0.0
    %210 = vmatpush.msra.mxu0 0.0
    %211 = vmatpush.msra.mxu0 0.0
    %212 = vmatpush.msra.mxu0 %v193
    %213 = vmatpush.msra.mxu0 %v192
    %214 = vmatpush.msra.mxu0 %v191
    %215 = vmatpush.msra.mxu0 %v190
    %216 = vmatpush.msra.mxu0 %v189
    %217 = vmatpush.msra.mxu0 %v188
    %218 = vmatpush.msra.mxu0 %v187
    %219 = vmatpush.msra.mxu0 %v186
    %220 = vmatmul.f32.gmra.mxu0 %v202
    %v221 = vpop.f32.mrf.mxu0
    %v222 = vadd.f32 %v198, %v221
    %223 = vdwg.mxu0
    %v224 = vadd.f32 %v222, %v222
    %v225 = vsel %vm84, %v222, %v224
    %v226 = vxor.u32 %v225, 2147483648
    %v227 = vmul.f32 %v226, 1.442695
    %v228 = vpow.pop %v227
    %v229 = vadd.f32 %v228, 1.0
    %v230 = vrcp.pop %v229
    %v231 = vmul.f32 %v229, %v230
    %v232 = vsub.f32 1.0, %v231
    %v233 = vmul.f32 %v230, %v232
    %v234 = vadd.f32 %v230, %v233
    %vm235 = vweird.f32 %v229
    %vm236 = vweird.f32 %v230
    %vm237 = vmor %vm235, %vm236
    %v238 = vsel %vm237, %v230, %v234
    %v239 = vand.u32 2147483647, %v229
    %vm240 = vcmp.eq.f32.partialorder %v239, 8.507059e+37
    %v241 = vand.u32 %v229, 2147483648
    %v242 = vor.u32 1.1754944e-38, %v241
    %v243 = vsel %vm240, %v242, %v238
    %v244 = vmul.f32 1.0, %v243
    %v245 = vadd.f32 %v244, %v244
    %v246 = vsub.f32 %v245, 1.0
    %v247 = vsel %vm84, %v244, %v246
    %v248 = vmul.f32 %v247, %v184
    %250 = vrot.lane.b32.xlu0 %v247, 32
    %v251 = vpop.permute.xlu0 %250
    %v253 = vmul.f32 %v247, %v251
    %255 = vrot.lane.b32.xlu0 %v253, 32
    %v256 = vpop.permute.xlu0 %255
    %v258 = vadd.f32 %v248, %v256
    %v259 = vtanh.pop %v258
    %261 = vrot.lane.b32.xlu0 %v259, 32
    %v262 = vpop.permute.xlu0 %261
    %v264 = vmul.f32 %v247, %v262
    %s265 = scalar_lea.vmem [#allocation11], 16
    %266 = vst [vmem:[%s265] sm:$0xff] %v247
    %268 = vrot.lane.b32.xlu0 %v264, 64
    %v269 = vpop.permute.xlu0 %268
    %271 = vst.msk [vmem:[%s265 + $0x8] sm:$0xff] %vm93, %v269
    %272 = vst.msk [vmem:[%s265 + $0x8] sm:$0xff] %vm177, %v258
    // Predicated region
    $region38: #{tpu_custom_call.1} parent=1 // pred_check
      _
    $region39: #{tpu_custom_call.1} parent=1 // pred_check_branch
      %274 = sbr.rel (0) target = $region41
    $region40: #{tpu_custom_call.1} parent=1 // pred_region
      %276 = vsyncadd [#allocation5], 0
      %s277 = sshll.u32 [#allocation11], 4
      %s278 = int_to_ptr.vmem [resolvable:$true] %s277
      %s279 = sshll.u32 %s5, 4
      %s280 = int_to_ptr.hbm [resolvable:$true] %s279
      %285 = dma.vmem_to_hbm [thread:$0]  %s278, 512, %s280, [#allocation5], 256, 256, 16
    $region41: #{tpu_custom_call.1} parent=1 // pred_fallthru
      _
    // Predicated region
    $region42: #{tpu_custom_call.1} parent=1 // pred_check
      _
    $region43: #{tpu_custom_call.1} parent=1 // pred_check_branch
      %287 = sbr.rel (0) target = $region45
    $region44: #{tpu_custom_call.1} parent=1 // pred_region
      %289 = dma.done [#allocation5], 512
    $region45: #{tpu_custom_call.1} parent=1 // pred_fallthru
      _
    %290 = vsyncpa [#allocation4], 1
    %291 = vsyncpa [#allocation7], 1
    %292 = vsyncpa [#allocation10], 1
    %293 = vsyncpa [#allocation5], 1

</llo_original>
